<compile_context>
chip_gen: v5e
topology: v5e:2x2
jax: 0.10.0
libtpu: 0.0.40
codegen_flags: <defaults>
</compile_context>

<pallas_src>
import jax
import jax.numpy as jnp
import numpy as np
from jax.experimental import pallas as pl
from jax.experimental.pallas import tpu as pltpu


# ----------------------------------------------------------------------------
# DDPM schedule (standard minDiffusion-style `ddpm_schedules`) -- glue.
# ----------------------------------------------------------------------------
def ddpm_schedules(beta1: float, beta2: float, T: int):
    beta_t = (beta2 - beta1) * jnp.arange(0, T + 1, dtype=jnp.float32) / T + beta1
    sqrt_beta_t = jnp.sqrt(beta_t)
    alpha_t = 1.0 - beta_t
    log_alpha_t = jnp.log(alpha_t)
    alphabar_t = jnp.exp(jnp.cumsum(log_alpha_t))
    sqrtab = jnp.sqrt(alphabar_t)
    oneover_sqrta = 1.0 / jnp.sqrt(alpha_t)
    sqrtmab = jnp.sqrt(1.0 - alphabar_t)
    mab_over_sqrtmab = (1.0 - alpha_t) / sqrtmab
    return dict(
        alpha_t=alpha_t,
        oneover_sqrta=oneover_sqrta,
        sqrt_beta_t=sqrt_beta_t,
        alphabar_t=alphabar_t,
        sqrtab=sqrtab,
        sqrtmab=sqrtmab,
        mab_over_sqrtmab=mab_over_sqrtmab,
    )


def _gelu_tanh(h):
    # tanh-approx GELU (EUP tanh + VPU elementwise), kept in f32.
    return 0.5 * h * (1.0 + jnp.tanh(0.7978845608028654 * (h + 0.044715 * h * h * h)))


# ----------------------------------------------------------------------------
# Pallas kernel: q-sample + eps-model forward + squared-error accumulation
# for a (TB, N, D) tile of batches.
# ----------------------------------------------------------------------------
def ddpm_forward_kernel(
    coef_a_ref,   # VMEM (TB, 1, 1)  sqrtab[_ts]   (per batch in tile)
    coef_m_ref,   # VMEM (TB, 1, 1)  sqrtmab[_ts]
    bias_ref,     # VMEM (TB, 1, H)  hoisted conditioning bias  c@Wc + t*Wt
    x_ref,        # VMEM (TB, N, D)  f32
    noise_ref,    # VMEM (TB, N, D)  f32
    w1_ref,       # VMEM (D, H)      bf16
    w2_ref,       # VMEM (H, D)      bf16
    sse_ref,      # VMEM (8, D)      f32 resident accumulator (per parallel idx)
):
    @pl.when(pl.program_id(1) == 0)
    def _init():
        sse_ref[...] = jnp.zeros_like(sse_ref)

    x = x_ref[...]          # (TB, N, D)
    noise = noise_ref[...]  # (TB, N, D)

    # forward diffusion: x_t = sqrtab[t_b] * x_b + sqrtmab[t_b] * noise_b
    x_t = coef_a_ref[...] * x + coef_m_ref[...] * noise   # per-batch broadcast

    tb, n, d = x.shape
    h_dim = w1_ref.shape[1]
    m = tb * n

    # eps-model: GELU(x_t @ W1 + bias) @ W2   (bf16 operands, f32 accumulation)
    h = jnp.dot(x_t.reshape(m, d).astype(jnp.bfloat16), w1_ref[...],
                preferred_element_type=jnp.float32)               # (M, H) f32
    h = h.reshape(tb, n, h_dim) + bias_ref[...]                   # + (TB,1,H)
    h = _gelu_tanh(h)
    eps_pred = jnp.dot(h.reshape(m, h_dim).astype(jnp.bfloat16), w2_ref[...],
                       preferred_element_type=jnp.float32)        # (M, D) f32

    # MSE numerator: fold the M rows into a full-vreg (8, D) partial sum.
    diff = noise.reshape(m, d) - eps_pred
    dsq = diff * diff
    sse_ref[...] += jnp.sum(dsq.reshape(m // 8, 8, d), axis=0)    # (8, D)


# ----------------------------------------------------------------------------
# Wrapper: DDPM.forward(x, c) -> scalar MSE loss
# ----------------------------------------------------------------------------
def ddpm_forward(params, sched, x, c, key, *, n_T=400, drop_prob=0.1,
                 batches_per_tile=2, num_partials=2):
    B, N, D = x.shape
    H = params["w1"].shape[1]

    k_t, k_noise, k_drop = jax.random.split(key, 3)

    # _ts = randint(1, n_T + 1, (B,));  noise = randn_like(x)          (glue)
    _ts = jax.random.randint(k_t, (B,), 1, n_T + 1)
    noise = jax.random.normal(k_noise, x.shape, dtype=jnp.float32)

    coef_a = sched["sqrtab"][_ts].astype(jnp.float32)    # (B,)
    coef_m = sched["sqrtmab"][_ts].astype(jnp.float32)   # (B,)
    t_norm = _ts.astype(jnp.float32) / float(n_T)        # (B,)

    # classifier-free-guidance context dropout (lives inside nn_model in torch)
    ctx_mask = jax.random.bernoulli(k_drop, drop_prob, (B, 1)).astype(jnp.float32)
    c_in = c * (1.0 - ctx_mask)

    # Hoisted conditioning bias: one well-shaped (B,C)@(C,H) matmul + t*Wt.
    bias = (c_in @ params["wc"] + t_norm[:, None] * params["wt"]).astype(jnp.float32)
    bias = bias.reshape(B, 1, H)

    coef_a3 = coef_a.reshape(B, 1, 1)
    coef_m3 = coef_m.reshape(B, 1, 1)

    # bf16 MXU operands (accumulation stays f32 inside the kernel).
    w1_bf = params["w1"].astype(jnp.bfloat16)
    w2_bf = params["w2"].astype(jnp.bfloat16)

    tb = batches_per_tile
    assert B % tb == 0 and (tb * N) % 8 == 0
    n_tiles = B // tb
    g_par = num_partials if (n_tiles % num_partials == 0) else 1
    g_arb = n_tiles // g_par

    def tile_idx(p, a):
        return p * g_arb + a

    grid_spec = pltpu.PrefetchScalarGridSpec(
        num_scalar_prefetch=0,
        grid=(g_par, g_arb),
        in_specs=[
            pl.BlockSpec((tb, 1, 1), lambda p, a: (tile_idx(p, a), 0, 0)),   # coef_a
            pl.BlockSpec((tb, 1, 1), lambda p, a: (tile_idx(p, a), 0, 0)),   # coef_m
            pl.BlockSpec((tb, 1, H), lambda p, a: (tile_idx(p, a), 0, 0)),   # bias
            pl.BlockSpec((tb, N, D), lambda p, a: (tile_idx(p, a), 0, 0)),   # x
            pl.BlockSpec((tb, N, D), lambda p, a: (tile_idx(p, a), 0, 0)),   # noise
            pl.BlockSpec((D, H), lambda p, a: (0, 0)),                       # w1 (bf16)
            pl.BlockSpec((H, D), lambda p, a: (0, 0)),                       # w2 (bf16)
        ],
        # one resident (8, D) accumulator block per parallel index
        out_specs=pl.BlockSpec((8, D), lambda p, a: (p, 0)),
    )

    sse = pl.pallas_call(
        ddpm_forward_kernel,
        out_shape=jax.ShapeDtypeStruct((g_par * 8, D), jnp.float32),
        grid_spec=grid_spec,
        compiler_params=pltpu.CompilerParams(
            dimension_semantics=("parallel", "arbitrary"),
            vmem_limit_bytes=32 * 1024 * 1024,
        ),
    )(coef_a3, coef_m3, bias, x, noise, w1_bf, w2_bf)

    # final tiny reduction of the per-core / per-sublane partials (glue)
    loss = jnp.sum(sse) / (B * N * D)

    # intermediates returned so the pure-JAX reference can be checked
    return loss, (noise, coef_a, coef_m, t_norm, c_in)


# Pure-JAX (f32) reference for correctness checking.
def ddpm_forward_ref(params, x, noise, coef_a, coef_m, t_norm, c_in):
    x_t = coef_a[:, None, None] * x + coef_m[:, None, None] * noise
    h = jnp.einsum("bnd,dh->bnh", x_t, params["w1"])
    h = h + (c_in @ params["wc"])[:, None, :]
    h = h + t_norm[:, None, None] * params["wt"][None, :, :]
    h = _gelu_tanh(h)
    eps_pred = jnp.einsum("bnh,hd->bnd", h, params["w2"])
    return jnp.mean((noise - eps_pred) ** 2)


# TODO(synk): DDPM.sample() is an inference-time host Python loop over n_T
# denoising steps (with per-step numpy snapshots); it is not part of forward()
# and is not translated here.


if __name__ == "__main__":
    # Small shapes consistent with the (B, N, D) token-feature layout; the
    # per-tile M axis is TB*N = 128 rows (one full MXU dimension).
    B, N, D, H, C = 4, 64, 128, 128, 32
    n_T = 400
    drop_prob = 0.1

    key = jax.random.PRNGKey(0)
    k_x, k_c, k_w1, k_wc, k_wt, k_w2, k_fwd = jax.random.split(key, 7)

    x = jax.random.normal(k_x, (B, N, D), dtype=jnp.float32)
    c = jax.random.normal(k_c, (B, C), dtype=jnp.float32)

    # Deterministic synthetic eps-model parameters.
    params = dict(
        w1=jax.random.normal(k_w1, (D, H), dtype=jnp.float32) * (1.0 / np.sqrt(D)),
        wc=jax.random.normal(k_wc, (C, H), dtype=jnp.float32) * (1.0 / np.sqrt(C)),
        wt=jax.random.normal(k_wt, (1, H), dtype=jnp.float32),
        w2=jax.random.normal(k_w2, (H, D), dtype=jnp.float32) * (1.0 / np.sqrt(H)),
    )

    sched = ddpm_schedules(1e-4, 0.02, n_T)

    loss, (noise, coef_a, coef_m, t_norm, c_in) = ddpm_forward(
        params, sched, x, c, k_fwd,
        n_T=n_T, drop_prob=drop_prob, batches_per_tile=2, num_partials=2,
    )
    loss = jax.block_until_ready(loss)

    loss_ref = jax.block_until_ready(
        ddpm_forward_ref(params, x, noise, coef_a, coef_m, t_norm, c_in)
    )

    # bf16 MXU operands (f32 accumulation) vs pure-f32 reference.
    np.testing.assert_allclose(np.asarray(loss), np.asarray(loss_ref),
                               rtol=3e-2, atol=3e-2)
    print("KERNEL_OK")
</pallas_src>

<mosaic_0001>
module attributes {stable_mosaic.version = 11 : i64} {
  func.func @ddpm_forward_kernel(%arg0: i32, %arg1: i32, %arg2: memref<2x1x1xf32, #tpu.memory_space<vmem>>, %arg3: memref<2x1x1xf32, #tpu.memory_space<vmem>>, %arg4: memref<2x1x128xf32, #tpu.memory_space<vmem>>, %arg5: memref<2x64x128xf32, #tpu.memory_space<vmem>>, %arg6: memref<2x64x128xf32, #tpu.memory_space<vmem>>, %arg7: memref<128x128xbf16, #tpu.memory_space<vmem>>, %arg8: memref<128x128xbf16, #tpu.memory_space<vmem>>, %arg9: memref<8x128xf32, #tpu.memory_space<vmem>>) attributes {dimension_semantics = [#tpu.dimension_semantics<parallel>, #tpu.dimension_semantics<arbitrary>], iteration_bounds = array<i64: 2, 1>, scalar_prefetch = 0 : i64, scratch_operands = 0 : i64, tpu.core_type = #tpu.core_type<tc>, window_params = [{transform_indices = @transform_0, window_bounds = array<i64: 2, 1, 1>}, {transform_indices = @transform_1, window_bounds = array<i64: 2, 1, 1>}, {transform_indices = @transform_2, window_bounds = array<i64: 2, 1, 128>}, {transform_indices = @transform_3, window_bounds = array<i64: 2, 64, 128>}, {transform_indices = @transform_4, window_bounds = array<i64: 2, 64, 128>}, {pipeline_mode = #tpu.pipeline_mode<synchronous>, transform_indices = @transform_5, window_bounds = array<i64: 128, 128>}, {pipeline_mode = #tpu.pipeline_mode<synchronous>, transform_indices = @transform_6, window_bounds = array<i64: 128, 128>}, {transform_indices = @transform_7, window_bounds = array<i64: 8, 128>}]} {
    %c0_i32 = arith.constant 0 : i32
    %0 = arith.cmpi eq, %arg1, %c0_i32 : i32
    %1 = arith.extui %0 : i1 to i32
    %c0_i32_0 = arith.constant 0 : i32
    %2 = arith.cmpi ne, %1, %c0_i32_0 : i32
    scf.if %2 {
      %cst_29 = arith.constant 0.000000e+00 : f32
      %45 = vector.broadcast %cst_29 : f32 to vector<8x128xf32>
      %c0_30 = arith.constant 0 : index
      %c0_31 = arith.constant 0 : index
      %46 = vector.load %arg9[%c0_30, %c0_31] : memref<8x128xf32, #tpu.memory_space<vmem>>, vector<8x128xf32>
      tpu.vector_store %arg9[%c0_30, %c0_31], %45 {strides = array<i32>} : memref<8x128xf32, #tpu.memory_space<vmem>>, vector<8x128xf32>,
    } else {
    }
    %c0 = arith.constant 0 : index
    %c0_1 = arith.constant 0 : index
    %c0_2 = arith.constant 0 : index
    %3 = vector.load %arg5[%c0, %c0_1, %c0_2] : memref<2x64x128xf32, #tpu.memory_space<vmem>>, vector<2x64x128xf32>
    %c0_3 = arith.constant 0 : index
    %c0_4 = arith.constant 0 : index
    %c0_5 = arith.constant 0 : index
    %4 = vector.load %arg6[%c0_3, %c0_4, %c0_5] : memref<2x64x128xf32, #tpu.memory_space<vmem>>, vector<2x64x128xf32>
    %c0_6 = arith.constant 0 : index
    %c0_7 = arith.constant 0 : index
    %c0_8 = arith.constant 0 : index
    %5 = vector.load %arg2[%c0_6, %c0_7, %c0_8] : memref<2x1x1xf32, #tpu.memory_space<vmem>>, vector<2x1x1xf32>
    %6 = vector.broadcast %5 : vector<2x1x1xf32> to vector<2x64x128xf32>
    %7 = arith.mulf %6, %3 : vector<2x64x128xf32>
    %c0_9 = arith.constant 0 : index
    %c0_10 = arith.constant 0 : index
    %c0_11 = arith.constant 0 : index
    %8 = vector.load %arg3[%c0_9, %c0_10, %c0_11] : memref<2x1x1xf32, #tpu.memory_space<vmem>>, vector<2x1x1xf32>
    %9 = vector.broadcast %8 : vector<2x1x1xf32> to vector<2x64x128xf32>
    %10 = arith.mulf %9, %4 : vector<2x64x128xf32>
    %11 = arith.addf %7, %10 : vector<2x64x128xf32>
    %12 = vector.shape_cast %11 : vector<2x64x128xf32> to vector<128x128xf32>
    %13 = arith.truncf %12 : vector<128x128xf32> to vector<128x128xbf16>
    %c0_12 = arith.constant 0 : index
    %c0_13 = arith.constant 0 : index
    %14 = vector.load %arg7[%c0_12, %c0_13] : memref<128x128xbf16, #tpu.memory_space<vmem>>, vector<128x128xbf16>
    %cst = arith.constant dense<0.000000e+00> : vector<128x128xf32>
    %15 = tpu.matmul %13, %14, %cst {dimension_numbers = #tpu.dot_dimension_numbers<[1], [0], [0], [1], [0, 0, 1, 1], [], []>} : vector<128x128xbf16>, vector<128x128xbf16>, vector<128x128xf32> -> vector<128x128xf32>
    %16 = vector.shape_cast %15 : vector<128x128xf32> to vector<2x64x128xf32>
    %c0_14 = arith.constant 0 : index
    %c0_15 = arith.constant 0 : index
    %c0_16 = arith.constant 0 : index
    %17 = vector.load %arg4[%c0_14, %c0_15, %c0_16] : memref<2x1x128xf32, #tpu.memory_space<vmem>>, vector<2x1x128xf32>
    %18 = vector.broadcast %17 : vector<2x1x128xf32> to vector<2x64x128xf32>
    %19 = arith.addf %16, %18 : vector<2x64x128xf32>
    %cst_17 = arith.constant 5.000000e-01 : f32
    %20 = vector.broadcast %cst_17 : f32 to vector<2x64x128xf32>
    %21 = arith.mulf %20, %19 : vector<2x64x128xf32>
    %cst_18 = arith.constant 4.471500e-02 : f32
    %22 = vector.broadcast %cst_18 : f32 to vector<2x64x128xf32>
    %23 = arith.mulf %22, %19 : vector<2x64x128xf32>
    %24 = arith.mulf %23, %19 : vector<2x64x128xf32>
    %25 = arith.mulf %24, %19 : vector<2x64x128xf32>
    %26 = arith.addf %19, %25 : vector<2x64x128xf32>
    %cst_19 = arith.constant 0.797884583 : f32
    %27 = vector.broadcast %cst_19 : f32 to vector<2x64x128xf32>
    %28 = arith.mulf %27, %26 : vector<2x64x128xf32>
    %29 = math.tanh %28 : vector<2x64x128xf32>
    %cst_20 = arith.constant 1.000000e+00 : f32
    %30 = vector.broadcast %cst_20 : f32 to vector<2x64x128xf32>
    %31 = arith.addf %30, %29 : vector<2x64x128xf32>
    %32 = arith.mulf %21, %31 : vector<2x64x128xf32>
    %33 = vector.shape_cast %32 : vector<2x64x128xf32> to vector<128x128xf32>
    %34 = arith.truncf %33 : vector<128x128xf32> to vector<128x128xbf16>
    %c0_21 = arith.constant 0 : index
    %c0_22 = arith.constant 0 : index
    %35 = vector.load %arg8[%c0_21, %c0_22] : memref<128x128xbf16, #tpu.memory_space<vmem>>, vector<128x128xbf16>
    %cst_23 = arith.constant dense<0.000000e+00> : vector<128x128xf32>
    %36 = tpu.matmul %34, %35, %cst_23 {dimension_numbers = #tpu.dot_dimension_numbers<[1], [0], [0], [1], [0, 0, 1, 1], [], []>} : vector<128x128xbf16>, vector<128x128xbf16>, vector<128x128xf32> -> vector<128x128xf32>
    %37 = vector.shape_cast %4 : vector<2x64x128xf32> to vector<128x128xf32>
    %38 = arith.subf %37, %36 : vector<128x128xf32>
    %39 = arith.mulf %38, %38 : vector<128x128xf32>
    %c0_24 = arith.constant 0 : index
    %c0_25 = arith.constant 0 : index
    %40 = vector.load %arg9[%c0_24, %c0_25] : memref<8x128xf32, #tpu.memory_space<vmem>>, vector<8x128xf32>
    %41 = vector.shape_cast %39 : vector<128x128xf32> to vector<16x8x128xf32>
    %cst_26 = arith.constant dense<0.000000e+00> : vector<8x128xf32>
    %42 = vector.multi_reduction <add>, %41, %cst_26 [0] : vector<16x8x128xf32> to vector<8x128xf32>
    %43 = arith.addf %40, %42 : vector<8x128xf32>
    %c0_27 = arith.constant 0 : index
    %c0_28 = arith.constant 0 : index
    %44 = vector.load %arg9[%c0_27, %c0_28] : memref<8x128xf32, #tpu.memory_space<vmem>>, vector<8x128xf32>
    tpu.vector_store %arg9[%c0_27, %c0_28], %43 {strides = array<i32>} : memref<8x128xf32, #tpu.memory_space<vmem>>, vector<8x128xf32>,
    return
  }
  func.func @transform_0(%arg0: i32, %arg1: i32) -> (i32, i32, i32) {
    %c1_i32 = arith.constant 1 : i32
    %0 = arith.muli %arg0, %c1_i32 : i32
    %1 = arith.addi %0, %arg1 : i32
    %c0_i32 = arith.constant 0 : i32
    %c0_i32_0 = arith.constant 0 : i32
    %c0_i32_1 = arith.constant 0 : i32
    return %1, %c0_i32, %c0_i32_0 : i32, i32, i32
  }
  func.func @transform_1(%arg0: i32, %arg1: i32) -> (i32, i32, i32) {
    %c1_i32 = arith.constant 1 : i32
    %0 = arith.muli %arg0, %c1_i32 : i32
    %1 = arith.addi %0, %arg1 : i32
    %c0_i32 = arith.constant 0 : i32
    %c0_i32_0 = arith.constant 0 : i32
    %c0_i32_1 = arith.constant 0 : i32
    return %1, %c0_i32, %c0_i32_0 : i32, i32, i32
  }
  func.func @transform_2(%arg0: i32, %arg1: i32) -> (i32, i32, i32) {
    %c1_i32 = arith.constant 1 : i32
    %0 = arith.muli %arg0, %c1_i32 : i32
    %1 = arith.addi %0, %arg1 : i32
    %c0_i32 = arith.constant 0 : i32
    %c0_i32_0 = arith.constant 0 : i32
    %c0_i32_1 = arith.constant 0 : i32
    return %1, %c0_i32, %c0_i32_0 : i32, i32, i32
  }
  func.func @transform_3(%arg0: i32, %arg1: i32) -> (i32, i32, i32) {
    %c1_i32 = arith.constant 1 : i32
    %0 = arith.muli %arg0, %c1_i32 : i32
    %1 = arith.addi %0, %arg1 : i32
    %c0_i32 = arith.constant 0 : i32
    %c0_i32_0 = arith.constant 0 : i32
    %c0_i32_1 = arith.constant 0 : i32
    return %1, %c0_i32, %c0_i32_0 : i32, i32, i32
  }
  func.func @transform_4(%arg0: i32, %arg1: i32) -> (i32, i32, i32) {
    %c1_i32 = arith.constant 1 : i32
    %0 = arith.muli %arg0, %c1_i32 : i32
    %1 = arith.addi %0, %arg1 : i32
    %c0_i32 = arith.constant 0 : i32
    %c0_i32_0 = arith.constant 0 : i32
    %c0_i32_1 = arith.constant 0 : i32
    return %1, %c0_i32, %c0_i32_0 : i32, i32, i32
  }
  func.func @transform_5(%arg0: i32, %arg1: i32) -> (i32, i32) {
    %c0_i32 = arith.constant 0 : i32
    %c0_i32_0 = arith.constant 0 : i32
    %c0_i32_1 = arith.constant 0 : i32
    return %c0_i32, %c0_i32_0 : i32, i32
  }
  func.func @transform_6(%arg0: i32, %arg1: i32) -> (i32, i32) {
    %c0_i32 = arith.constant 0 : i32
    %c0_i32_0 = arith.constant 0 : i32
    %c0_i32_1 = arith.constant 0 : i32
    return %c0_i32, %c0_i32_0 : i32, i32
  }
  func.func @transform_7(%arg0: i32, %arg1: i32) -> (i32, i32) {
    %c0_i32 = arith.constant 0 : i32
    %c0_i32_0 = arith.constant 0 : i32
    return %arg0, %c0_i32 : i32, i32
  }
}

</mosaic_0001>

<llo_original>
// kernel: tpu_custom_call.1
$region0: #{tpu_custom_call.1}
  #allocation0 [shape = 'u32[]', space=smem, size = 0x4, offset = 0x4, fixed_abs, tag = 'smem constant byte address 0x4 - core index']
  #allocation1 [shape = 'u32[72,128]{1,0:T(1,128)}', space=vmem, size = 0x9000, scoped, tag = 'internal scratch']
  %s0 = inlined_call_operand.vmem [shape: f32[4,1,1], index: 0, kind: input, shape index: {}]
  %s1 = inlined_call_operand.vmem [shape: f32[4,1,1], index: 1, kind: input, shape index: {}]
  %s2 = inlined_call_operand.vmem [shape: f32[4,1,128], index: 2, kind: input, shape index: {}]
  %s3 = inlined_call_operand.hbm [shape: f32[4,64,128], index: 3, kind: input, shape index: {}]
  %s4 = inlined_call_operand.hbm [shape: f32[4,64,128], index: 4, kind: input, shape index: {}]
  %s5 = inlined_call_operand.hbm [shape: bf16[128,128], index: 5, kind: input, shape index: {}]
  %s6 = inlined_call_operand.hbm [shape: bf16[128,128], index: 6, kind: input, shape index: {}]
  %s7 = inlined_call_operand.hbm [shape: f32[16,128], index: 7, kind: output, shape index: {}]
  %s8 = sld [smem:[#allocation0]]
  $region81: #{tpu_custom_call.1} parent=0
    _
  %s10 = ssub.s32 1, %s8
  %s11 = scalar_select 0, %s10, %s8
  $region1: #{tpu_custom_call.1} parent=0
    #allocation2 [shape = 'u8[131072]{0}', space=vmem, size = 0x20000, scoped, tag = 'input window, operand 3']
    #allocation3 [shape = 's32[2]{0}', space=sflag, size = 0x8, scoped, tag = 'scoped memory for tpu_custom_call.1']
    #allocation4 [shape = 's32[2]{0}', space=sflag, size = 0x8, scoped, tag = 'scoped memory for tpu_custom_call.1']
    #allocation5 [shape = 'u8[131072]{0}', space=vmem, size = 0x20000, scoped, tag = 'input window, operand 4']
    #allocation6 [shape = 's32[2]{0}', space=sflag, size = 0x8, scoped, tag = 'scoped memory for tpu_custom_call.1']
    #allocation7 [shape = 'u8[32768]{0}', space=vmem, size = 0x8000, scoped, tag = 'input window, operand 5, single buffered']
    #allocation8 [shape = 'u8[32768]{0}', space=vmem, size = 0x8000, scoped, tag = 'input window, operand 6, single buffered']
    #allocation9 [shape = 's32[1]{0}', space=sflag, size = 0x4, scoped, tag = 'scoped memory for tpu_custom_call.1']
    #allocation10 [shape = 'u8[8192]{0}', space=vmem, size = 0x2000, scoped, tag = 'output window, operand 0']
    %12 = vsyncpa [#allocation3], 0
    %s13 = scalar_lea.sflag [#allocation3], 1
    %14 = vsyncpa %s13, 0
    %15 = vsyncpa [#allocation6], 0
    %s16 = scalar_lea.sflag [#allocation6], 1
    %17 = vsyncpa %s16, 0
    %18 = vsyncpa [#allocation9], 0
    %19 = vsyncpa [#allocation4], 0
    %s20 = scalar_lea.sflag [#allocation4], 1
    %21 = vsyncpa %s20, 0
    loop: start=0, step=1, limit=4
    $region2: #{tpu_custom_call.1} parent=1 // loop_pre_header
      _
    $region3: #{tpu_custom_call.1} parent=1 // loop_header
      %s23 = sphi 0, %s27
      %p24 = scmp.ge.s32.totalorder %s23, 4
      %s30 = sphi 0, %s42
      %s31 = sphi 0, %s38
      %s32 = sphi 0, %s30
      %s33 = sphi 0, %s31
      %s34 = sphi 0, %s32
      %s35 = sphi 0, %s33
      %s47 = sphi 0, %s49
      %s50 = sphi 0, %s47
      %s51 = sphi 0, %s50
      %s67 = sphi 0, %s51
      %s75 = sphi 0, %s77
      %s78 = sphi 0, %s75
      %s79 = sphi 0, %s78
      %s95 = sphi 0, %s79
      %s103 = sphi 0, %s105
      %s106 = sphi 0, %s103
      %s107 = sphi 0, %s106
      %s123 = sphi 0, %s107
      %s131 = sphi 0, %s133
      %s134 = sphi 0, %s131
      %s135 = sphi 0, %s134
      %s151 = sphi 0, %s135
      %s159 = sphi 0, %s161
      %s162 = sphi 0, %s159
      %s163 = sphi 0, %s162
      %s179 = sphi 0, %s163
      %s183 = sphi 0, %s183
      %s185 = sphi 0, %s183
      %s186 = sphi 0, %s185
      %s200 = sphi 0, %s186
      %s204 = sphi 0, %s204
      %s206 = sphi 0, %s204
      %s207 = sphi 0, %s206
      %s221 = sphi 0, %s207
      %s227 = sphi 0, %s229
      %s230 = sphi 0, %s227
      %s231 = sphi 0, %s230
      %s247 = sphi 0, %s231
    $region4: #{tpu_custom_call.1} parent=1 // loop_header_branch
      %26 = sbr.rel (%p24) target = $region8
    $region5: #{tpu_custom_call.1} parent=1 // loop_body
      %s28 = ssub.s32 %s23, 1
      %s29 = ssub.s32 %s23, 2
      %s36 = sadd.s32 1, %s31
      %p37 = scmp.ge.s32.totalorder %s36, 1
      %s38 = scalar_select %p37, 0, %s36
      %s39 = sadd.s32 1, %s30
      %s40 = scalar_select %p37, %s39, %s30
      %p41 = scmp.ge.s32.totalorder %s40, 2
      %s42 = scalar_select %p41, 0, %s40
      %s43 = sadd.s32 %s30, %s31
      %s44 = sadd.s32 %s42, %s38
      %s45 = ssub.s32 %s43, %s44
      %p46 = scmp.eq.s32.totalorder %s45, 0
      %s48 = sadd.s32 %s47, 1
      %s49 = scalar_select %p46, %s47, %s48
      %p52 = pneg %p46
      %p53 = scmp.eq.s32.totalorder %s23, 1
      %p54 = por %p52, %p53
      %p55 = scmp.ne.s32.totalorder %s47, %s50
      %p56 = scmp.eq.s32.totalorder %s23, 0
      %p57 = por %p55, %p56
      %p58 = scmp.ne.s32.totalorder %s47, %s50
      %p59 = scmp.eq.s32.totalorder %s28, 1
      %p60 = por %p58, %p59
      %p61 = scmp.ne.s32.totalorder %s50, %s51
      %p62 = scmp.eq.s32.totalorder %s28, 0
      %p63 = por %p61, %p62
      %p64 = scmp.ne.s32.totalorder %s50, %s51
      %p65 = scmp.eq.s32.totalorder %s29, 1
      %p66 = por %p64, %p65
      %p68 = scmp.ne.s32.totalorder %s51, %s67
      %p69 = scmp.eq.s32.totalorder %s29, 0
      %p70 = por %p68, %p69
      %s71 = sadd.s32 %s30, %s31
      %s72 = sadd.s32 %s42, %s38
      %s73 = ssub.s32 %s71, %s72
      %p74 = scmp.eq.s32.totalorder %s73, 0
      %s76 = sadd.s32 %s75, 1
      %s77 = scalar_select %p74, %s75, %s76
      %p80 = pneg %p74
      %p81 = scmp.eq.s32.totalorder %s23, 1
      %p82 = por %p80, %p81
      %p83 = scmp.ne.s32.totalorder %s75, %s78
      %p84 = scmp.eq.s32.totalorder %s23, 0
      %p85 = por %p83, %p84
      %p86 = scmp.ne.s32.totalorder %s75, %s78
      %p87 = scmp.eq.s32.totalorder %s28, 1
      %p88 = por %p86, %p87
      %p89 = scmp.ne.s32.totalorder %s78, %s79
      %p90 = scmp.eq.s32.totalorder %s28, 0
      %p91 = por %p89, %p90
      %p92 = scmp.ne.s32.totalorder %s78, %s79
      %p93 = scmp.eq.s32.totalorder %s29, 1
      %p94 = por %p92, %p93
      %p96 = scmp.ne.s32.totalorder %s79, %s95
      %p97 = scmp.eq.s32.totalorder %s29, 0
      %p98 = por %p96, %p97
      %s99 = sadd.s32 %s30, %s31
      %s100 = sadd.s32 %s42, %s38
      %s101 = ssub.s32 %s99, %s100
      %p102 = scmp.eq.s32.totalorder %s101, 0
      %s104 = sadd.s32 %s103, 1
      %s105 = scalar_select %p102, %s103, %s104
      %p108 = pneg %p102
      %p109 = scmp.eq.s32.totalorder %s23, 1
      %p110 = por %p108, %p109
      %p111 = scmp.ne.s32.totalorder %s103, %s106
      %p112 = scmp.eq.s32.totalorder %s23, 0
      %p113 = por %p111, %p112
      %p114 = scmp.ne.s32.totalorder %s103, %s106
      %p115 = scmp.eq.s32.totalorder %s28, 1
      %p116 = por %p114, %p115
      %p117 = scmp.ne.s32.totalorder %s106, %s107
      %p118 = scmp.eq.s32.totalorder %s28, 0
      %p119 = por %p117, %p118
      %p120 = scmp.ne.s32.totalorder %s106, %s107
      %p121 = scmp.eq.s32.totalorder %s29, 1
      %p122 = por %p120, %p121
      %p124 = scmp.ne.s32.totalorder %s107, %s123
      %p125 = scmp.eq.s32.totalorder %s29, 0
      %p126 = por %p124, %p125
      %s127 = sadd.s32 %s30, %s31
      %s128 = sadd.s32 %s42, %s38
      %s129 = ssub.s32 %s127, %s128
      %p130 = scmp.eq.s32.totalorder %s129, 0
      %s132 = sadd.s32 %s131, 1
      %s133 = scalar_select %p130, %s131, %s132
      %p136 = pneg %p130
      %p137 = scmp.eq.s32.totalorder %s23, 1
      %p138 = por %p136, %p137
      %p139 = scmp.ne.s32.totalorder %s131, %s134
      %p140 = scmp.eq.s32.totalorder %s23, 0
      %p141 = por %p139, %p140
      %p142 = scmp.ne.s32.totalorder %s131, %s134
      %p143 = scmp.eq.s32.totalorder %s28, 1
      %p144 = por %p142, %p143
      %p145 = scmp.ne.s32.totalorder %s134, %s135
      %p146 = scmp.eq.s32.totalorder %s28, 0
      %p147 = por %p145, %p146
      %p148 = scmp.ne.s32.totalorder %s134, %s135
      %p149 = scmp.eq.s32.totalorder %s29, 1
      %p150 = por %p148, %p149
      %p152 = scmp.ne.s32.totalorder %s135, %s151
      %p153 = scmp.eq.s32.totalorder %s29, 0
      %p154 = por %p152, %p153
      %s155 = sadd.s32 %s30, %s31
      %s156 = sadd.s32 %s42, %s38
      %s157 = ssub.s32 %s155, %s156
      %p158 = scmp.eq.s32.totalorder %s157, 0
      %s160 = sadd.s32 %s159, 1
      %s161 = scalar_select %p158, %s159, %s160
      %p164 = pneg %p158
      %p165 = scmp.eq.s32.totalorder %s23, 1
      %p166 = por %p164, %p165
      %p167 = scmp.ne.s32.totalorder %s159, %s162
      %p168 = scmp.eq.s32.totalorder %s23, 0
      %p169 = por %p167, %p168
      %p170 = scmp.ne.s32.totalorder %s159, %s162
      %p171 = scmp.eq.s32.totalorder %s28, 1
      %p172 = por %p170, %p171
      %p173 = scmp.ne.s32.totalorder %s162, %s163
      %p174 = scmp.eq.s32.totalorder %s28, 0
      %p175 = por %p173, %p174
      %p176 = scmp.ne.s32.totalorder %s162, %s163
      %p177 = scmp.eq.s32.totalorder %s29, 1
      %p178 = por %p176, %p177
      %p180 = scmp.ne.s32.totalorder %s163, %s179
      %p181 = scmp.eq.s32.totalorder %s29, 0
      %p182 = por %p180, %p181
      %s184 = sadd.s32 %s183, 1
      %p187 = scmp.eq.s32.totalorder %s23, 1
      %p188 = scmp.ne.s32.totalorder %s183, %s185
      %p189 = scmp.eq.s32.totalorder %s23, 0
      %p190 = por %p188, %p189
      %p191 = scmp.ne.s32.totalorder %s183, %s185
      %p192 = scmp.eq.s32.totalorder %s28, 1
      %p193 = por %p191, %p192
      %p194 = scmp.ne.s32.totalorder %s185, %s186
      %p195 = scmp.eq.s32.totalorder %s28, 0
      %p196 = por %p194, %p195
      %p197 = scmp.ne.s32.totalorder %s185, %s186
      %p198 = scmp.eq.s32.totalorder %s29, 1
      %p199 = por %p197, %p198
      %p201 = scmp.ne.s32.totalorder %s186, %s200
      %p202 = scmp.eq.s32.totalorder %s29, 0
      %p203 = por %p201, %p202
      %s205 = sadd.s32 %s204, 1
      %p208 = scmp.eq.s32.totalorder %s23, 1
      %p209 = scmp.ne.s32.totalorder %s204, %s206
      %p210 = scmp.eq.s32.totalorder %s23, 0
      %p211 = por %p209, %p210
      %p212 = scmp.ne.s32.totalorder %s204, %s206
      %p213 = scmp.eq.s32.totalorder %s28, 1
      %p214 = por %p212, %p213
      %p215 = scmp.ne.s32.totalorder %s206, %s207
      %p216 = scmp.eq.s32.totalorder %s28, 0
      %p217 = por %p215, %p216
      %p218 = scmp.ne.s32.totalorder %s206, %s207
      %p219 = scmp.eq.s32.totalorder %s29, 1
      %p220 = por %p218, %p219
      %p222 = scmp.ne.s32.totalorder %s207, %s221
      %p223 = scmp.eq.s32.totalorder %s29, 0
      %p224 = por %p222, %p223
      %s225 = ssub.s32 %s30, %s42
      %p226 = scmp.eq.s32.totalorder %s225, 0
      %s228 = sadd.s32 %s227, 1
      %s229 = scalar_select %p226, %s227, %s228
      %p232 = pneg %p226
      %p233 = scmp.eq.s32.totalorder %s23, 1
      %p234 = por %p232, %p233
      %p235 = scmp.ne.s32.totalorder %s227, %s230
      %p236 = scmp.eq.s32.totalorder %s23, 0
      %p237 = por %p235, %p236
      %p238 = scmp.ne.s32.totalorder %s227, %s230
      %p239 = scmp.eq.s32.totalorder %s28, 1
      %p240 = por %p238, %p239
      %p241 = scmp.ne.s32.totalorder %s230, %s231
      %p242 = scmp.eq.s32.totalorder %s28, 0
      %p243 = por %p241, %p242
      %p244 = scmp.ne.s32.totalorder %s230, %s231
      %p245 = scmp.eq.s32.totalorder %s29, 1
      %p246 = por %p244, %p245
      %p248 = scmp.ne.s32.totalorder %s231, %s247
      %p249 = scmp.eq.s32.totalorder %s29, 0
      %p250 = por %p248, %p249
      %p251 = scmp.le.s32.totalorder 1, %s23
      %p252 = scmp.lt.s32.totalorder %s23, 3
      %p253 = pnand %p251, %p252
      %p254 = pneg %p253
      // Predicated region
      $region9: #{tpu_custom_call.1} parent=5 // pred_check
        _
      $region10: #{tpu_custom_call.1} parent=5 // pred_check_branch
        %256 = sbr.rel (%p253) target = $region12
      $region11: #{tpu_custom_call.1} parent=5 // pred_region
        %s257 = ssub.s32 %s23, 1
        // Predicated region
        $region13: #{tpu_custom_call.1} parent=11 // pred_check
          %p258 = pneg %p196
        $region14: #{tpu_custom_call.1} parent=11 // pred_check_branch
          %260 = sbr.rel (%p258) target = $region16
        $region15: #{tpu_custom_call.1} parent=11 // pred_region
          %262 = vsyncadd [#allocation6], 0
          %s263 = sshll.u32 %s5, 4
          %s264 = int_to_ptr.hbm [resolvable:$true] %s263
          %s265 = sshll.u32 [#allocation7], 4
          %s266 = int_to_ptr.vmem [resolvable:$true] %s265
          %271 = dma.hbm_to_vmem [thread:$0]  %s264, 1024, %s266, [#allocation6], 64, 64, 4
        $region16: #{tpu_custom_call.1} parent=11 // pred_fallthru
          _
        // Predicated region
        $region17: #{tpu_custom_call.1} parent=11 // pred_check
          %p272 = pneg %p217
        $region18: #{tpu_custom_call.1} parent=11 // pred_check_branch
          %274 = sbr.rel (%p272) target = $region20
        $region19: #{tpu_custom_call.1} parent=11 // pred_region
          %276 = vsyncadd [#allocation9], 0
          %s277 = sshll.u32 %s6, 4
          %s278 = int_to_ptr.hbm [resolvable:$true] %s277
          %s279 = sshll.u32 [#allocation8], 4
          %s280 = int_to_ptr.vmem [resolvable:$true] %s279
          %285 = dma.hbm_to_vmem [thread:$0]  %s278, 1024, %s280, [#allocation9], 64, 64, 4
        $region20: #{tpu_custom_call.1} parent=11 // pred_fallthru
          _
      $region12: #{tpu_custom_call.1} parent=5 // pred_fallthru
        _
      %p286 = scmp.lt.s32.totalorder %s23, 2
      // Predicated region
      $region21: #{tpu_custom_call.1} parent=5 // pred_check
        %p287 = pneg %p286
      $region22: #{tpu_custom_call.1} parent=5 // pred_check_branch
        %289 = sbr.rel (%p287) target = $region24
      $region23: #{tpu_custom_call.1} parent=5 // pred_region
        // Predicated region
        $region25: #{tpu_custom_call.1} parent=23 // pred_check
          %p290 = pneg %p57
        $region26: #{tpu_custom_call.1} parent=23 // pred_check_branch
          %292 = sbr.rel (%p290) target = $region28
        $region27: #{tpu_custom_call.1} parent=23 // pred_region
          %s293 = sadd.s32 %s30, %s31
          %s294 = smul.u32 2, %s293
          %p295 = scmp.lt.s32.totalorder %s294, 3
          %s296 = scalar_select %p295, %s294, 3
          %s297 = scalar_lea.vmem %s0, %s296
          %s298 = sadd.s32 %s30, %s31
          %s299 = smul.u32 2, %s298
        $region28: #{tpu_custom_call.1} parent=23 // pred_fallthru
          _
        // Predicated region
        $region29: #{tpu_custom_call.1} parent=23 // pred_check
          %p300 = pneg %p85
        $region30: #{tpu_custom_call.1} parent=23 // pred_check_branch
          %302 = sbr.rel (%p300) target = $region32
        $region31: #{tpu_custom_call.1} parent=23 // pred_region
          %s303 = sadd.s32 %s30, %s31
          %s304 = smul.u32 2, %s303
          %p305 = scmp.lt.s32.totalorder %s304, 3
          %s306 = scalar_select %p305, %s304, 3
          %s307 = scalar_lea.vmem %s1, %s306
          %s308 = sadd.s32 %s30, %s31
          %s309 = smul.u32 2, %s308
        $region32: #{tpu_custom_call.1} parent=23 // pred_fallthru
          _
        // Predicated region
        $region33: #{tpu_custom_call.1} parent=23 // pred_check
          %p310 = pneg %p113
        $region34: #{tpu_custom_call.1} parent=23 // pred_check_branch
          %312 = sbr.rel (%p310) target = $region36
        $region35: #{tpu_custom_call.1} parent=23 // pred_region
          %s313 = sadd.s32 %s30, %s31
          %s314 = smul.u32 2, %s313
          %p315 = scmp.lt.s32.totalorder %s314, 3
          %s316 = scalar_select %p315, %s314, 3
          %s317 = scalar_lea.vmem %s2, %s316
          %s318 = sadd.s32 %s30, %s31
          %s319 = smul.u32 2, %s318
        $region36: #{tpu_custom_call.1} parent=23 // pred_fallthru
          _
        // Predicated region
        $region37: #{tpu_custom_call.1} parent=23 // pred_check
          %p320 = pneg %p141
        $region38: #{tpu_custom_call.1} parent=23 // pred_check_branch
          %322 = sbr.rel (%p320) target = $region40
        $region39: #{tpu_custom_call.1} parent=23 // pred_region
          %s323 = sand.u32 %s131, 1
          %s324 = scalar_lea.sflag [#allocation3], %s323
          %s325 = sand.u32 %s131, 1
          %s326 = smul.addr %s325, 128
          %s327 = scalar_lea.vmem [#allocation2], %s326
          %s328 = sadd.s32 %s30, %s31
          %s329 = smul.u32 2, %s328
          %331 = vsyncadd %s324, 0
          %s332 = smul.addr %s329, 8
          %s333 = smul.addr %s332, 8
          %s334 = scalar_lea.hbm %s3, %s333
          %s335 = sshll.u32 %s334, 4
          %s336 = int_to_ptr.hbm [resolvable:$true] %s335
          %s337 = sshll.u32 %s327, 4
          %s338 = int_to_ptr.vmem [resolvable:$true] %s337
          %343 = dma.hbm_to_vmem [thread:$0]  %s336, 2048, %s338, %s324, 128, 128, 8
        $region40: #{tpu_custom_call.1} parent=23 // pred_fallthru
          _
        // Predicated region
        $region41: #{tpu_custom_call.1} parent=23 // pred_check
          %p344 = pneg %p169
        $region42: #{tpu_custom_call.1} parent=23 // pred_check_branch
          %346 = sbr.rel (%p344) target = $region44
        $region43: #{tpu_custom_call.1} parent=23 // pred_region
          %s347 = sand.u32 %s23, 1
          %s348 = scalar_lea.sflag [#allocation6], %s347
          %s349 = sand.u32 %s159, 1
          %s350 = smul.addr %s349, 128
          %s351 = scalar_lea.vmem [#allocation5], %s350
          %s352 = sadd.s32 %s30, %s31
          %s353 = smul.u32 2, %s352
          %355 = vsyncadd %s348, 0
          %s356 = smul.addr %s353, 8
          %s357 = smul.addr %s356, 8
          %s358 = scalar_lea.hbm %s4, %s357
          %s359 = sshll.u32 %s358, 4
          %s360 = int_to_ptr.hbm [resolvable:$true] %s359
          %s361 = sshll.u32 %s351, 4
          %s362 = int_to_ptr.vmem [resolvable:$true] %s361
          %367 = dma.hbm_to_vmem [thread:$0]  %s360, 2048, %s362, %s348, 128, 128, 8
        $region44: #{tpu_custom_call.1} parent=23 // pred_fallthru
          _
      $region24: #{tpu_custom_call.1} parent=5 // pred_fallthru
        _
      %p368 = scmp.le.s32.totalorder 1, %s23
      %p369 = scmp.lt.s32.totalorder %s23, 3
      %p370 = pnand %p368, %p369
      %p371 = pneg %p370
      // Predicated region
      $region45: #{tpu_custom_call.1} parent=5 // pred_check
        _
      $region46: #{tpu_custom_call.1} parent=5 // pred_check_branch
        %373 = sbr.rel (%p370) target = $region48
      $region47: #{tpu_custom_call.1} parent=5 // pred_region
        %s374 = ssub.s32 %s23, 1
        %s375 = sand.u32 %s134, 1
        %s376 = scalar_lea.sflag [#allocation3], %s375
        %s377 = sand.u32 %s134, 1
        %s378 = smul.addr %s377, 128
        %s379 = scalar_lea.vmem [#allocation2], %s378
        // Predicated region
        $region49: #{tpu_custom_call.1} parent=47 // pred_check
          %p380 = pneg %p147
        $region50: #{tpu_custom_call.1} parent=47 // pred_check_branch
          %382 = sbr.rel (%p380) target = $region52
        $region51: #{tpu_custom_call.1} parent=47 // pred_region
          %384 = dma.done %s376, 2048
        $region52: #{tpu_custom_call.1} parent=47 // pred_fallthru
          _
        %s385 = sand.u32 %s28, 1
        %s386 = scalar_lea.sflag [#allocation6], %s385
        %s387 = sand.u32 %s162, 1
        %s388 = smul.addr %s387, 128
        %s389 = scalar_lea.vmem [#allocation5], %s388
        // Predicated region
        $region53: #{tpu_custom_call.1} parent=47 // pred_check
          %p390 = pneg %p175
        $region54: #{tpu_custom_call.1} parent=47 // pred_check_branch
          %392 = sbr.rel (%p390) target = $region56
        $region55: #{tpu_custom_call.1} parent=47 // pred_region
          %394 = dma.done %s386, 2048
        $region56: #{tpu_custom_call.1} parent=47 // pred_fallthru
          _
        // Predicated region
        $region57: #{tpu_custom_call.1} parent=47 // pred_check
          %p395 = pneg %p196
        $region58: #{tpu_custom_call.1} parent=47 // pred_check_branch
          %397 = sbr.rel (%p395) target = $region60
        $region59: #{tpu_custom_call.1} parent=47 // pred_region
          %399 = dma.done [#allocation6], 1024
        $region60: #{tpu_custom_call.1} parent=47 // pred_fallthru
          _
        // Predicated region
        $region61: #{tpu_custom_call.1} parent=47 // pred_check
          %p400 = pneg %p217
        $region62: #{tpu_custom_call.1} parent=47 // pred_check_branch
          %402 = sbr.rel (%p400) target = $region64
        $region63: #{tpu_custom_call.1} parent=47 // pred_region
          %404 = dma.done [#allocation9], 1024
        $region64: #{tpu_custom_call.1} parent=47 // pred_fallthru
          _
        %s405 = sadd.s32 %s32, %s33
        %s406 = smul.u32 2, %s405
        %p407 = scmp.lt.s32.totalorder %s406, 3
        %s408 = scalar_select %p407, %s406, 3
        %s409 = scalar_lea.vmem %s0, %s408
        %p410 = pneg %p63
        %p411 = pneg %p60
        %s412 = sadd.s32 %s32, %s33
        %s413 = smul.u32 2, %s412
        %p414 = scmp.lt.s32.totalorder %s413, 3
        %s415 = scalar_select %p414, %s413, 3
        %s416 = scalar_lea.vmem %s1, %s415
        %p417 = pneg %p91
        %p418 = pneg %p88
        %s419 = sadd.s32 %s32, %s33
        %s420 = smul.u32 2, %s419
        %p421 = scmp.lt.s32.totalorder %s420, 3
        %s422 = scalar_select %p421, %s420, 3
        %s423 = scalar_lea.vmem %s2, %s422
        %p424 = pneg %p119
        %p425 = pneg %p116
        %s426 = sand.u32 %s134, 1
        %s427 = scalar_lea.sflag [#allocation3], %s426
        %s428 = sand.u32 %s134, 1
        %s429 = smul.addr %s428, 128
        %s430 = scalar_lea.vmem [#allocation2], %s429
        %p431 = pneg %p147
        %p432 = pneg %p144
        %s433 = sand.u32 %s28, 1
        %s434 = scalar_lea.sflag [#allocation6], %s433
        %s435 = sand.u32 %s162, 1
        %s436 = smul.addr %s435, 128
        %s437 = scalar_lea.vmem [#allocation5], %s436
        %p438 = pneg %p175
        %p439 = pneg %p172
        %p440 = pneg %p196
        %p441 = pneg %p193
        %p442 = pneg %p217
        %p443 = pneg %p214
        %p444 = pneg %p243
        %p445 = pneg %p240
        %s446 = sand.u32 %s230, 1
        %s447 = scalar_lea.sflag [#allocation4], %s446
        %s448 = sand.u32 %s230, 1
        %s449 = smul.addr %s448, 8
        %s450 = scalar_lea.vmem [#allocation10], %s449
        %s451 = sadd.s32 %s32, %s33
        %s452 = smul.u32 2, %s451
        %p453 = scmp.lt.s32.totalorder %s452, 3
        %s454 = scalar_select %p453, %s452, 3
        %s455 = scalar_lea.vmem %s0, %s454
        %s456 = sadd.s32 %s32, %s33
        %s457 = smul.u32 2, %s456
        %s458 = sadd.s32 %s32, %s33
        %s459 = smul.u32 2, %s458
        %p460 = scmp.lt.s32.totalorder %s459, 3
        %s461 = scalar_select %p460, %s459, 3
        %s462 = scalar_lea.vmem %s1, %s461
        %s463 = sadd.s32 %s32, %s33
        %s464 = smul.u32 2, %s463
        %s465 = sadd.s32 %s32, %s33
        %s466 = smul.u32 2, %s465
        %p467 = scmp.lt.s32.totalorder %s466, 3
        %s468 = scalar_select %p467, %s466, 3
        %s469 = scalar_lea.vmem %s2, %s468
        %s470 = sadd.s32 %s32, %s33
        %s471 = smul.u32 2, %s470
        %s472 = sadd.s32 %s32, %s33
        %s473 = smul.u32 2, %s472
        %s474 = sadd.s32 %s32, %s33
        %s475 = smul.u32 2, %s474
        %p476 = scmp.eq.s32.totalorder %s33, 0
        // Predicated region
        $region65: #{tpu_custom_call.1} parent=47 // pred_check
          %p477 = pneg %p476
        $region66: #{tpu_custom_call.1} parent=47 // pred_check_branch
          %479 = sbr.rel (%p477) target = $region68
        $region67: #{tpu_custom_call.1} parent=47 // pred_region
          %480 = vst [vmem:[%s450] sm:$0xff] 0.0
        $region68: #{tpu_custom_call.1} parent=47 // pred_fallthru
          _
        %v481 = vld [vmem:[%s379] sm:$0xff]
        %v482 = vld [vmem:[%s379 + $0x8] sm:$0xff]
        %v483 = vld [vmem:[%s379 + $0x10] sm:$0xff]
        %v484 = vld [vmem:[%s379 + $0x18] sm:$0xff]
        %v485 = vld [vmem:[%s379 + $0x20] sm:$0xff]
        %v486 = vld [vmem:[%s379 + $0x28] sm:$0xff]
        %v487 = vld [vmem:[%s379 + $0x30] sm:$0xff]
        %v488 = vld [vmem:[%s379 + $0x38] sm:$0xff]
        %v489 = vld [vmem:[%s379 + $0x40] sm:$0xff]
        %v490 = vld [vmem:[%s379 + $0x48] sm:$0xff]
        %v491 = vld [vmem:[%s379 + $0x50] sm:$0xff]
        %v492 = vld [vmem:[%s379 + $0x58] sm:$0xff]
        %v493 = vld [vmem:[%s379 + $0x60] sm:$0xff]
        %v494 = vld [vmem:[%s379 + $0x68] sm:$0xff]
        %v495 = vld [vmem:[%s379 + $0x70] sm:$0xff]
        %v496 = vld [vmem:[%s379 + $0x78] sm:$0xff]
        %v497 = vld [vmem:[%s389] sm:$0xff]
        %v498 = vld [vmem:[%s389 + $0x8] sm:$0xff]
        %v499 = vld [vmem:[%s389 + $0x10] sm:$0xff]
        %v500 = vld [vmem:[%s389 + $0x18] sm:$0xff]
        %v501 = vld [vmem:[%s389 + $0x20] sm:$0xff]
        %v502 = vld [vmem:[%s389 + $0x28] sm:$0xff]
        %v503 = vld [vmem:[%s389 + $0x30] sm:$0xff]
        %v504 = vld [vmem:[%s389 + $0x38] sm:$0xff]
        %v505 = vld [vmem:[%s389 + $0x40] sm:$0xff]
        %v506 = vld [vmem:[%s389 + $0x48] sm:$0xff]
        %v507 = vld [vmem:[%s389 + $0x50] sm:$0xff]
        %v508 = vld [vmem:[%s389 + $0x58] sm:$0xff]
        %v509 = vld [vmem:[%s389 + $0x60] sm:$0xff]
        %v510 = vld [vmem:[%s389 + $0x68] sm:$0xff]
        %v511 = vld [vmem:[%s389 + $0x70] sm:$0xff]
        %v512 = vld [vmem:[%s389 + $0x78] sm:$0xff]
        %v513 = vld [vmem:[%s455] sm:$0x1]
        %v514 = vld [vmem:[%s455 + $0x1] sm:$0x1]
        %v517 = vperm.slane %v513, 0
        %v518 = vperm.slane %v514, 0
        %519 = vset.pattern.permute.xlu0 0
        %520 = vperm.xlu0 %519, %v517
        %v521 = vpop.permute.xlu0 %520
        %523 = vset.pattern.permute.xlu0 0
        %524 = vperm.xlu0 %523, %v518
        %v525 = vpop.permute.xlu0 %524
        %v527 = vmul.f32 %v521, %v481
        %v528 = vmul.f32 %v521, %v482
        %v529 = vmul.f32 %v521, %v483
        %v530 = vmul.f32 %v521, %v484
        %v531 = vmul.f32 %v521, %v485
        %v532 = vmul.f32 %v521, %v486
        %v533 = vmul.f32 %v521, %v487
        %v534 = vmul.f32 %v521, %v488
        %v535 = vmul.f32 %v525, %v489
        %v536 = vmul.f32 %v525, %v490
        %v537 = vmul.f32 %v525, %v491
        %v538 = vmul.f32 %v525, %v492
        %v539 = vmul.f32 %v525, %v493
        %v540 = vmul.f32 %v525, %v494
        %v541 = vmul.f32 %v525, %v495
        %v542 = vmul.f32 %v525, %v496
        %v543 = vld [vmem:[%s462] sm:$0x1]
        %v544 = vld [vmem:[%s462 + $0x1] sm:$0x1]
        %v547 = vperm.slane %v543, 0
        %v548 = vperm.slane %v544, 0
        %549 = vset.pattern.permute.xlu0 0
        %550 = vperm.xlu0 %549, %v547
        %v551 = vpop.permute.xlu0 %550
        %553 = vset.pattern.permute.xlu0 0
        %554 = vperm.xlu0 %553, %v548
        %v555 = vpop.permute.xlu0 %554
        %v557 = vmul.f32 %v551, %v497
        %v558 = vmul.f32 %v551, %v498
        %v559 = vmul.f32 %v551, %v499
        %v560 = vmul.f32 %v551, %v500
        %v561 = vmul.f32 %v551, %v501
        %v562 = vmul.f32 %v551, %v502
        %v563 = vmul.f32 %v551, %v503
        %v564 = vmul.f32 %v551, %v504
        %v565 = vmul.f32 %v555, %v505
        %v566 = vmul.f32 %v555, %v506
        %v567 = vmul.f32 %v555, %v507
        %v568 = vmul.f32 %v555, %v508
        %v569 = vmul.f32 %v555, %v509
        %v570 = vmul.f32 %v555, %v510
        %v571 = vmul.f32 %v555, %v511
        %v572 = vmul.f32 %v555, %v512
        %v573 = vadd.f32 %v527, %v557
        %v574 = vadd.f32 %v528, %v558
        %v575 = vadd.f32 %v529, %v559
        %v576 = vadd.f32 %v530, %v560
        %v577 = vadd.f32 %v531, %v561
        %v578 = vadd.f32 %v532, %v562
        %v579 = vadd.f32 %v533, %v563
        %v580 = vadd.f32 %v534, %v564
        %v581 = vadd.f32 %v535, %v565
        %v582 = vadd.f32 %v536, %v566
        %v583 = vadd.f32 %v537, %v567
        %v584 = vadd.f32 %v538, %v568
        %v585 = vadd.f32 %v539, %v569
        %v586 = vadd.f32 %v540, %v570
        %v587 = vadd.f32 %v541, %v571
        %v588 = vadd.f32 %v542, %v572
        %v589 = vpack.c.bf16 %v574, %v573
        %v590 = vpack.c.bf16 %v576, %v575
        %v591 = vpack.c.bf16 %v578, %v577
        %v592 = vpack.c.bf16 %v580, %v579
        %v593 = vpack.c.bf16 %v582, %v581
        %v594 = vpack.c.bf16 %v584, %v583
        %v595 = vpack.c.bf16 %v586, %v585
        %v596 = vpack.c.bf16 %v588, %v587
        %v597 = vld [vmem:[#allocation7] sm:$0xf]
        %v598 = vld [vmem:[#allocation7 + $0x4] sm:$0xf]
        %v599 = vld [vmem:[#allocation7 + $0x8] sm:$0xf]
        %v600 = vld [vmem:[#allocation7 + $0xc] sm:$0xf]
        %v601 = vld [vmem:[#allocation7 + $0x10] sm:$0xf]
        %v602 = vld [vmem:[#allocation7 + $0x14] sm:$0xf]
        %v603 = vld [vmem:[#allocation7 + $0x18] sm:$0xf]
        %v604 = vld [vmem:[#allocation7 + $0x1c] sm:$0xf]
        %v605 = vld [vmem:[#allocation7 + $0x20] sm:$0xf]
        %v606 = vld [vmem:[#allocation7 + $0x24] sm:$0xf]
        %v607 = vld [vmem:[#allocation7 + $0x28] sm:$0xf]
        %v608 = vld [vmem:[#allocation7 + $0x2c] sm:$0xf]
        %v609 = vld [vmem:[#allocation7 + $0x30] sm:$0xf]
        %v610 = vld [vmem:[#allocation7 + $0x34] sm:$0xf]
        %v611 = vld [vmem:[#allocation7 + $0x38] sm:$0xf]
        %v612 = vld [vmem:[#allocation7 + $0x3c] sm:$0xf]
        %v629 = vunpack.c.l.b16 %v597
        %v630 = vunpack.c.l.b16 %v598
        %v631 = vunpack.c.l.b16 %v599
        %v632 = vunpack.c.l.b16 %v600
        %v633 = vunpack.c.l.b16 %v601
        %v634 = vunpack.c.l.b16 %v602
        %v635 = vunpack.c.l.b16 %v603
        %v636 = vunpack.c.l.b16 %v604
        %v637 = vunpack.c.l.b16 %v605
        %v638 = vunpack.c.l.b16 %v606
        %v639 = vunpack.c.l.b16 %v607
        %v640 = vunpack.c.l.b16 %v608
        %v641 = vunpack.c.l.b16 %v609
        %v642 = vunpack.c.l.b16 %v610
        %v643 = vunpack.c.l.b16 %v611
        %v644 = vunpack.c.l.b16 %v612
        %v645 = vpack.c.b16 %v630, %v629
        %v646 = vpack.c.b16 %v632, %v631
        %v647 = vpack.c.b16 %v634, %v633
        %v648 = vpack.c.b16 %v636, %v635
        %v649 = vpack.c.b16 %v638, %v637
        %v650 = vpack.c.b16 %v640, %v639
        %v651 = vpack.c.b16 %v642, %v641
        %v652 = vpack.c.b16 %v644, %v643
        %661 = vmatpush.bf16.msra.mxu0 %v652
        %662 = vmatpush.bf16.msra.mxu0 %v651
        %663 = vmatpush.bf16.msra.mxu0 %v650
        %664 = vmatpush.bf16.msra.mxu0 %v649
        %665 = vmatpush.bf16.msra.mxu0 %v648
        %666 = vmatpush.bf16.msra.mxu0 %v647
        %667 = vmatpush.bf16.msra.mxu0 %v646
        %668 = vmatpush.bf16.msra.mxu0 %v645
        %669 = vmatmul.bf16.gmra.mxu0 %v589
        %v670 = vpop.f32.mrf.mxu0
        %v671 = vadd.f32 0.0, %v670
        %v672 = vpop.f32.mrf.mxu0
        %v673 = vadd.f32 0.0, %v672
        %674 = vmatmul.bf16.gmra.mxu0 %v590
        %v675 = vpop.f32.mrf.mxu0
        %v676 = vadd.f32 0.0, %v675
        %v677 = vpop.f32.mrf.mxu0
        %v678 = vadd.f32 0.0, %v677
        %679 = vmatmul.bf16.gmra.mxu0 %v591
        %v680 = vpop.f32.mrf.mxu0
        %v681 = vadd.f32 0.0, %v680
        %v682 = vpop.f32.mrf.mxu0
        %v683 = vadd.f32 0.0, %v682
        %684 = vmatmul.bf16.gmra.mxu0 %v592
        %v685 = vpop.f32.mrf.mxu0
        %v686 = vadd.f32 0.0, %v685
        %v687 = vpop.f32.mrf.mxu0
        %v688 = vadd.f32 0.0, %v687
        %689 = vmatmul.bf16.gmra.mxu0 %v593
        %v690 = vpop.f32.mrf.mxu0
        %v691 = vadd.f32 0.0, %v690
        %v692 = vpop.f32.mrf.mxu0
        %v693 = vadd.f32 0.0, %v692
        %694 = vmatmul.bf16.gmra.mxu0 %v594
        %v695 = vpop.f32.mrf.mxu0
        %v696 = vadd.f32 0.0, %v695
        %v697 = vpop.f32.mrf.mxu0
        %v698 = vadd.f32 0.0, %v697
        %699 = vmatmul.bf16.gmra.mxu0 %v595
        %v700 = vpop.f32.mrf.mxu0
        %v701 = vadd.f32 0.0, %v700
        %v702 = vpop.f32.mrf.mxu0
        %v703 = vadd.f32 0.0, %v702
        %704 = vmatmul.bf16.gmra.mxu0 %v596
        %v705 = vpop.f32.mrf.mxu0
        %v706 = vadd.f32 0.0, %v705
        %v707 = vpop.f32.mrf.mxu0
        %v708 = vadd.f32 0.0, %v707
        %709 = vdwg.mxu0
        %v710 = vld [vmem:[%s469] sm:$0x1]
        %v711 = vld [vmem:[%s469 + $0x1] sm:$0x1]
        %v714 = vperm.slane %v710, 0
        %v715 = vperm.slane %v711, 0
        %v718 = vadd.f32 %v671, %v714
        %v719 = vadd.f32 %v673, %v714
        %v720 = vadd.f32 %v676, %v714
        %v721 = vadd.f32 %v678, %v714
        %v722 = vadd.f32 %v681, %v714
        %v723 = vadd.f32 %v683, %v714
        %v724 = vadd.f32 %v686, %v714
        %v725 = vadd.f32 %v688, %v714
        %v726 = vadd.f32 %v691, %v715
        %v727 = vadd.f32 %v693, %v715
        %v728 = vadd.f32 %v696, %v715
        %v729 = vadd.f32 %v698, %v715
        %v730 = vadd.f32 %v701, %v715
        %v731 = vadd.f32 %v703, %v715
        %v732 = vadd.f32 %v706, %v715
        %v733 = vadd.f32 %v708, %v715
        %v734 = vmul.f32 %v718, 0.5
        %v735 = vmul.f32 %v719, 0.5
        %v736 = vmul.f32 %v720, 0.5
        %v737 = vmul.f32 %v721, 0.5
        %v738 = vmul.f32 %v722, 0.5
        %v739 = vmul.f32 %v723, 0.5
        %v740 = vmul.f32 %v724, 0.5
        %v741 = vmul.f32 %v725, 0.5
        %v742 = vmul.f32 %v726, 0.5
        %v743 = vmul.f32 %v727, 0.5
        %v744 = vmul.f32 %v728, 0.5
        %v745 = vmul.f32 %v729, 0.5
        %v746 = vmul.f32 %v730, 0.5
        %v747 = vmul.f32 %v731, 0.5
        %v748 = vmul.f32 %v732, 0.5
        %v749 = vmul.f32 %v733, 0.5
        %v750 = vmul.f32 %v718, 0.044715
        %v751 = vmul.f32 %v719, 0.044715
        %v752 = vmul.f32 %v720, 0.044715
        %v753 = vmul.f32 %v721, 0.044715
        %v754 = vmul.f32 %v722, 0.044715
        %v755 = vmul.f32 %v723, 0.044715
        %v756 = vmul.f32 %v724, 0.044715
        %v757 = vmul.f32 %v725, 0.044715
        %v758 = vmul.f32 %v726, 0.044715
        %v759 = vmul.f32 %v727, 0.044715
        %v760 = vmul.f32 %v728, 0.044715
        %v761 = vmul.f32 %v729, 0.044715
        %v762 = vmul.f32 %v730, 0.044715
        %v763 = vmul.f32 %v731, 0.044715
        %v764 = vmul.f32 %v732, 0.044715
        %v765 = vmul.f32 %v733, 0.044715
        %v766 = vmul.f32 %v750, %v718
        %v767 = vmul.f32 %v751, %v719
        %v768 = vmul.f32 %v752, %v720
        %v769 = vmul.f32 %v753, %v721
        %v770 = vmul.f32 %v754, %v722
        %v771 = vmul.f32 %v755, %v723
        %v772 = vmul.f32 %v756, %v724
        %v773 = vmul.f32 %v757, %v725
        %v774 = vmul.f32 %v758, %v726
        %v775 = vmul.f32 %v759, %v727
        %v776 = vmul.f32 %v760, %v728
        %v777 = vmul.f32 %v761, %v729
        %v778 = vmul.f32 %v762, %v730
        %v779 = vmul.f32 %v763, %v731
        %v780 = vmul.f32 %v764, %v732
        %v781 = vmul.f32 %v765, %v733
        %v782 = vmul.f32 %v766, %v718
        %v783 = vmul.f32 %v767, %v719
        %v784 = vmul.f32 %v768, %v720
        %v785 = vmul.f32 %v769, %v721
        %v786 = vmul.f32 %v770, %v722
        %v787 = vmul.f32 %v771, %v723
        %v788 = vmul.f32 %v772, %v724
        %v789 = vmul.f32 %v773, %v725
        %v790 = vmul.f32 %v774, %v726
        %v791 = vmul.f32 %v775, %v727
        %v792 = vmul.f32 %v776, %v728
        %v793 = vmul.f32 %v777, %v729
        %v794 = vmul.f32 %v778, %v730
        %v795 = vmul.f32 %v779, %v731
        %v796 = vmul.f32 %v780, %v732
        %v797 = vmul.f32 %v781, %v733
        %v798 = vadd.f32 %v718, %v782
        %v799 = vadd.f32 %v719, %v783
        %v800 = vadd.f32 %v720, %v784
        %v801 = vadd.f32 %v721, %v785
        %v802 = vadd.f32 %v722, %v786
        %v803 = vadd.f32 %v723, %v787
        %v804 = vadd.f32 %v724, %v788
        %v805 = vadd.f32 %v725, %v789
        %v806 = vadd.f32 %v726, %v790
        %v807 = vadd.f32 %v727, %v791
        %v808 = vadd.f32 %v728, %v792
        %v809 = vadd.f32 %v729, %v793
        %v810 = vadd.f32 %v730, %v794
        %v811 = vadd.f32 %v731, %v795
        %v812 = vadd.f32 %v732, %v796
        %v813 = vadd.f32 %v733, %v797
        %v814 = vmul.f32 %v798, 0.7978846
        %v815 = vmul.f32 %v799, 0.7978846
        %v816 = vmul.f32 %v800, 0.7978846
        %v817 = vmul.f32 %v801, 0.7978846
        %v818 = vmul.f32 %v802, 0.7978846
        %v819 = vmul.f32 %v803, 0.7978846
        %v820 = vmul.f32 %v804, 0.7978846
        %v821 = vmul.f32 %v805, 0.7978846
        %v822 = vmul.f32 %v806, 0.7978846
        %v823 = vmul.f32 %v807, 0.7978846
        %v824 = vmul.f32 %v808, 0.7978846
        %v825 = vmul.f32 %v809, 0.7978846
        %v826 = vmul.f32 %v810, 0.7978846
        %v827 = vmul.f32 %v811, 0.7978846
        %v828 = vmul.f32 %v812, 0.7978846
        %v829 = vmul.f32 %v813, 0.7978846
        %v830 = vtanh.pop %v814
        %v831 = vtanh.pop %v815
        %v832 = vtanh.pop %v816
        %v833 = vtanh.pop %v817
        %v834 = vtanh.pop %v818
        %v835 = vtanh.pop %v819
        %v836 = vtanh.pop %v820
        %v837 = vtanh.pop %v821
        %v838 = vtanh.pop %v822
        %v839 = vtanh.pop %v823
        %v840 = vtanh.pop %v824
        %v841 = vtanh.pop %v825
        %v842 = vtanh.pop %v826
        %v843 = vtanh.pop %v827
        %v844 = vtanh.pop %v828
        %v845 = vtanh.pop %v829
        %v846 = vadd.f32 %v830, 1.0
        %v847 = vadd.f32 %v831, 1.0
        %v848 = vadd.f32 %v832, 1.0
        %v849 = vadd.f32 %v833, 1.0
        %v850 = vadd.f32 %v834, 1.0
        %v851 = vadd.f32 %v835, 1.0
        %v852 = vadd.f32 %v836, 1.0
        %v853 = vadd.f32 %v837, 1.0
        %v854 = vadd.f32 %v838, 1.0
        %v855 = vadd.f32 %v839, 1.0
        %v856 = vadd.f32 %v840, 1.0
        %v857 = vadd.f32 %v841, 1.0
        %v858 = vadd.f32 %v842, 1.0
        %v859 = vadd.f32 %v843, 1.0
        %v860 = vadd.f32 %v844, 1.0
        %v861 = vadd.f32 %v845, 1.0
        %v862 = vmul.f32 %v734, %v846
        %v863 = vmul.f32 %v735, %v847
        %v864 = vmul.f32 %v736, %v848
        %v865 = vmul.f32 %v737, %v849
        %v866 = vmul.f32 %v738, %v850
        %v867 = vmul.f32 %v739, %v851
        %v868 = vmul.f32 %v740, %v852
        %v869 = vmul.f32 %v741, %v853
        %v870 = vmul.f32 %v742, %v854
        %v871 = vmul.f32 %v743, %v855
        %v872 = vmul.f32 %v744, %v856
        %v873 = vmul.f32 %v745, %v857
        %v874 = vmul.f32 %v746, %v858
        %v875 = vmul.f32 %v747, %v859
        %v876 = vmul.f32 %v748, %v860
        %v877 = vmul.f32 %v749, %v861
        %v878 = vpack.c.bf16 %v863, %v862
        %v879 = vpack.c.bf16 %v865, %v864
        %v880 = vpack.c.bf16 %v867, %v866
        %v881 = vpack.c.bf16 %v869, %v868
        %v882 = vpack.c.bf16 %v871, %v870
        %v883 = vpack.c.bf16 %v873, %v872
        %v884 = vpack.c.bf16 %v875, %v874
        %v885 = vpack.c.bf16 %v877, %v876
        %v886 = vld [vmem:[#allocation8] sm:$0xf]
        %v887 = vld [vmem:[#allocation8 + $0x4] sm:$0xf]
        %v888 = vld [vmem:[#allocation8 + $0x8] sm:$0xf]
        %v889 = vld [vmem:[#allocation8 + $0xc] sm:$0xf]
        %v890 = vld [vmem:[#allocation8 + $0x10] sm:$0xf]
        %v891 = vld [vmem:[#allocation8 + $0x14] sm:$0xf]
        %v892 = vld [vmem:[#allocation8 + $0x18] sm:$0xf]
        %v893 = vld [vmem:[#allocation8 + $0x1c] sm:$0xf]
        %v894 = vld [vmem:[#allocation8 + $0x20] sm:$0xf]
        %v895 = vld [vmem:[#allocation8 + $0x24] sm:$0xf]
        %v896 = vld [vmem:[#allocation8 + $0x28] sm:$0xf]
        %v897 = vld [vmem:[#allocation8 + $0x2c] sm:$0xf]
        %v898 = vld [vmem:[#allocation8 + $0x30] sm:$0xf]
        %v899 = vld [vmem:[#allocation8 + $0x34] sm:$0xf]
        %v900 = vld [vmem:[#allocation8 + $0x38] sm:$0xf]
        %v901 = vld [vmem:[#allocation8 + $0x3c] sm:$0xf]
        %v918 = vunpack.c.l.b16 %v886
        %v919 = vunpack.c.l.b16 %v887
        %v920 = vunpack.c.l.b16 %v888
        %v921 = vunpack.c.l.b16 %v889
        %v922 = vunpack.c.l.b16 %v890
        %v923 = vunpack.c.l.b16 %v891
        %v924 = vunpack.c.l.b16 %v892
        %v925 = vunpack.c.l.b16 %v893
        %v926 = vunpack.c.l.b16 %v894
        %v927 = vunpack.c.l.b16 %v895
        %v928 = vunpack.c.l.b16 %v896
        %v929 = vunpack.c.l.b16 %v897
        %v930 = vunpack.c.l.b16 %v898
        %v931 = vunpack.c.l.b16 %v899
        %v932 = vunpack.c.l.b16 %v900
        %v933 = vunpack.c.l.b16 %v901
        %v934 = vpack.c.b16 %v919, %v918
        %v935 = vpack.c.b16 %v921, %v920
        %v936 = vpack.c.b16 %v923, %v922
        %v937 = vpack.c.b16 %v925, %v924
        %v938 = vpack.c.b16 %v927, %v926
        %v939 = vpack.c.b16 %v929, %v928
        %v940 = vpack.c.b16 %v931, %v930
        %v941 = vpack.c.b16 %v933, %v932
        %950 = vmatpush.bf16.msra.mxu0 %v941
        %951 = vmatpush.bf16.msra.mxu0 %v940
        %952 = vmatpush.bf16.msra.mxu0 %v939
        %953 = vmatpush.bf16.msra.mxu0 %v938
        %954 = vmatpush.bf16.msra.mxu0 %v937
        %955 = vmatpush.bf16.msra.mxu0 %v936
        %956 = vmatpush.bf16.msra.mxu0 %v935
        %957 = vmatpush.bf16.msra.mxu0 %v934
        %958 = vmatmul.bf16.gmra.mxu0 %v878
        %v959 = vpop.f32.mrf.mxu0
        %v960 = vadd.f32 0.0, %v959
        %v961 = vpop.f32.mrf.mxu0
        %v962 = vadd.f32 0.0, %v961
        %963 = vmatmul.bf16.gmra.mxu0 %v879
        %v964 = vpop.f32.mrf.mxu0
        %v965 = vadd.f32 0.0, %v964
        %v966 = vpop.f32.mrf.mxu0
        %v967 = vadd.f32 0.0, %v966
        %968 = vmatmul.bf16.gmra.mxu0 %v880
        %v969 = vpop.f32.mrf.mxu0
        %v970 = vadd.f32 0.0, %v969
        %v971 = vpop.f32.mrf.mxu0
        %v972 = vadd.f32 0.0, %v971
        %973 = vmatmul.bf16.gmra.mxu0 %v881
        %v974 = vpop.f32.mrf.mxu0
        %v975 = vadd.f32 0.0, %v974
        %v976 = vpop.f32.mrf.mxu0
        %v977 = vadd.f32 0.0, %v976
        %978 = vmatmul.bf16.gmra.mxu0 %v882
        %v979 = vpop.f32.mrf.mxu0
        %v980 = vadd.f32 0.0, %v979
        %v981 = vpop.f32.mrf.mxu0
        %v982 = vadd.f32 0.0, %v981
        %983 = vmatmul.bf16.gmra.mxu0 %v883
        %v984 = vpop.f32.mrf.mxu0
        %v985 = vadd.f32 0.0, %v984
        %v986 = vpop.f32.mrf.mxu0
        %v987 = vadd.f32 0.0, %v986
        %988 = vmatmul.bf16.gmra.mxu0 %v884
        %v989 = vpop.f32.mrf.mxu0
        %v990 = vadd.f32 0.0, %v989
        %v991 = vpop.f32.mrf.mxu0
        %v992 = vadd.f32 0.0, %v991
        %993 = vmatmul.bf16.gmra.mxu0 %v885
        %v994 = vpop.f32.mrf.mxu0
        %v995 = vadd.f32 0.0, %v994
        %v996 = vpop.f32.mrf.mxu0
        %v997 = vadd.f32 0.0, %v996
        %998 = vdwg.mxu0
        %v999 = vsub.f32 %v497, %v960
        %v1000 = vsub.f32 %v498, %v962
        %v1001 = vsub.f32 %v499, %v965
        %v1002 = vsub.f32 %v500, %v967
        %v1003 = vsub.f32 %v501, %v970
        %v1004 = vsub.f32 %v502, %v972
        %v1005 = vsub.f32 %v503, %v975
        %v1006 = vsub.f32 %v504, %v977
        %v1007 = vsub.f32 %v505, %v980
        %v1008 = vsub.f32 %v506, %v982
        %v1009 = vsub.f32 %v507, %v985
        %v1010 = vsub.f32 %v508, %v987
        %v1011 = vsub.f32 %v509, %v990
        %v1012 = vsub.f32 %v510, %v992
        %v1013 = vsub.f32 %v511, %v995
        %v1014 = vsub.f32 %v512, %v997
        %v1015 = vmul.f32 %v999, %v999
        %v1016 = vmul.f32 %v1000, %v1000
        %v1017 = vmul.f32 %v1001, %v1001
        %v1018 = vmul.f32 %v1002, %v1002
        %v1019 = vmul.f32 %v1003, %v1003
        %v1020 = vmul.f32 %v1004, %v1004
        %v1021 = vmul.f32 %v1005, %v1005
        %v1022 = vmul.f32 %v1006, %v1006
        %v1023 = vmul.f32 %v1007, %v1007
        %v1024 = vmul.f32 %v1008, %v1008
        %v1025 = vmul.f32 %v1009, %v1009
        %v1026 = vmul.f32 %v1010, %v1010
        %v1027 = vmul.f32 %v1011, %v1011
        %v1028 = vmul.f32 %v1012, %v1012
        %v1029 = vmul.f32 %v1013, %v1013
        %v1030 = vmul.f32 %v1014, %v1014
        %v1031 = vld [vmem:[%s450] sm:$0xff]
        %v1032 = vadd.f32 %v1015, %v1016
        %v1033 = vadd.f32 %v1032, %v1017
        %v1034 = vadd.f32 %v1033, %v1018
        %v1035 = vadd.f32 %v1034, %v1019
        %v1036 = vadd.f32 %v1035, %v1020
        %v1037 = vadd.f32 %v1036, %v1021
        %v1038 = vadd.f32 %v1037, %v1022
        %v1039 = vadd.f32 %v1038, %v1023
        %v1040 = vadd.f32 %v1039, %v1024
        %v1041 = vadd.f32 %v1040, %v1025
        %v1042 = vadd.f32 %v1041, %v1026
        %v1043 = vadd.f32 %v1042, %v1027
        %v1044 = vadd.f32 %v1043, %v1028
        %v1045 = vadd.f32 %v1044, %v1029
        %v1046 = vadd.f32 %v1045, %v1030
        %v1047 = vadd.f32 %v1031, %v1046
        %1048 = vst [vmem:[%s450] sm:$0xff] %v1047
        %s1049 = sand.u32 %s230, 1
        %s1050 = scalar_lea.sflag [#allocation4], %s1049
        %s1051 = sand.u32 %s230, 1
        %s1052 = smul.addr %s1051, 8
        %s1053 = scalar_lea.vmem [#allocation10], %s1052
        // Predicated region
        $region69: #{tpu_custom_call.1} parent=47 // pred_check
          %p1054 = pneg %p240
        $region70: #{tpu_custom_call.1} parent=47 // pred_check_branch
          %1056 = sbr.rel (%p1054) target = $region72
        $region71: #{tpu_custom_call.1} parent=47 // pred_region
          %1058 = vsyncadd %s1050, 0
          %s1059 = smul.addr %s32, 8
          %s1060 = scalar_lea.hbm %s7, %s1059
          %s1062 = sshll.u32 %s1053, 4
          %s1063 = int_to_ptr.vmem [resolvable:$true] %s1062
          %s1064 = sshll.u32 %s1060, 4
          %s1065 = int_to_ptr.hbm [resolvable:$true] %s1064
          %1067 = dma.vmem_to_hbm [thread:$0]  %s1063, 128, %s1065, %s1050
        $region72: #{tpu_custom_call.1} parent=47 // pred_fallthru
          _
      $region48: #{tpu_custom_call.1} parent=5 // pred_fallthru
        _
      %p1068 = scmp.le.s32.totalorder 2, %s23
      // Predicated region
      $region73: #{tpu_custom_call.1} parent=5 // pred_check
        %p1069 = pneg %p1068
      $region74: #{tpu_custom_call.1} parent=5 // pred_check_branch
        %1071 = sbr.rel (%p1069) target = $region76
      $region75: #{tpu_custom_call.1} parent=5 // pred_region
        %s1072 = ssub.s32 %s23, 2
        // Predicated region
        $region77: #{tpu_custom_call.1} parent=75 // pred_check
          %p1073 = pneg %p246
        $region78: #{tpu_custom_call.1} parent=75 // pred_check_branch
          %1075 = sbr.rel (%p1073) target = $region80
        $region79: #{tpu_custom_call.1} parent=75 // pred_region
          %s1076 = sand.u32 %s231, 1
          %s1077 = scalar_lea.sflag [#allocation4], %s1076
          %s1078 = sand.u32 %s231, 1
          %s1079 = smul.addr %s1078, 8
          %s1080 = scalar_lea.vmem [#allocation10], %s1079
          %1082 = dma.done %s1077, 128
        $region80: #{tpu_custom_call.1} parent=75 // pred_fallthru
          _
      $region76: #{tpu_custom_call.1} parent=5 // pred_fallthru
        _
    $region6: #{tpu_custom_call.1} parent=1 // loop_footer
      %s27 = sadd.s32 1, %s23
    $region7: #{tpu_custom_call.1} parent=1 // loop_footer_branch
      %22 = sbr.rel target = $region3
    $region8: #{tpu_custom_call.1} parent=1 // loop_exit
      _
    %1083 = vsyncpa [#allocation3], 1
    %s1084 = scalar_lea.sflag [#allocation3], 1
    %1085 = vsyncpa %s1084, 1
    %1086 = vsyncpa [#allocation6], 1
    %s1087 = scalar_lea.sflag [#allocation6], 1
    %1088 = vsyncpa %s1087, 1
    %1089 = vsyncpa [#allocation9], 1
    %1090 = vsyncpa [#allocation4], 1
    %s1091 = scalar_lea.sflag [#allocation4], 1
    %1092 = vsyncpa %s1091, 1

</llo_original>
